<compile_context>
chip_gen: v7x
topology: tpu7x:2x2x1
jax: 0.10.0
libtpu: 0.0.40
codegen_flags: <defaults>
</compile_context>

<pallas_src>
import functools

import jax
import jax.numpy as jnp
from jax.experimental import pallas as pl
from jax.experimental.pallas import tpu as pltpu

_LANE = 128          # lane width: last-dim alignment for dense MXU passes / vst
_SUBLANE_F32 = 8     # f32 sublane: granularity of the batch (second-minor) tile
_MAX_TB = 512        # upper bound on the batch tile (near HBM roofline)


def _round_up(n, m):
    return (n + m - 1) // m * m


def _vmem_capacity_bytes():
    """Physical VMEM per TensorCore (conservative fallback = v7x's 64 MiB/TC)."""
    try:
        return int(pltpu.get_tpu_info().vmem_capacity_bytes)
    except Exception:
        return 64 * 1024 * 1024


def _vmem_footprint_bytes(tb, din, h, c, x_itemsize, w_itemsize, weight_buffers):
    """Approximate VMEM footprint of one kernel instance for batch tile `tb`."""
    weights = weight_buffers * (din * h + h * h + h * c) * w_itemsize
    biases = weight_buffers * (h + h + c) * 4
    x_tiles = 2 * tb * din * x_itemsize      # double-buffered input tile
    o_tiles = 2 * tb * c * 4                 # double-buffered f32 output tile
    interm = 2 * tb * h * (4 + w_itemsize)   # f32 + bf16 copies of h1 / h2
    return weights + biases + x_tiles + o_tiles + interm


def _choose_tb(batch, max_tb):
    """Pick a power-of-two batch tile <= max_tb.

    Prefer (a) <= 12.5% zero-row padding and (b) >= 2 grid steps (so the x/out DMA
    pipeline actually overlaps compute and both TensorCores get work on megacore
    parts); among the survivors take the largest tile.
    """
    b0 = _round_up(batch, _SUBLANE_F32)
    cands = []
    tb = _SUBLANE_F32
    while tb <= max(max_tb, _SUBLANE_F32):
        b_pad = _round_up(b0, tb)
        cands.append((tb, b_pad, b_pad // tb, (b_pad - batch) / b_pad))
        tb *= 2
    low_waste = [c for c in cands if c[3] <= 0.125] or cands
    multi = [c for c in low_waste if c[2] >= 2] or low_waste
    tb, b_pad, _, _ = max(multi, key=lambda c: c[0])
    return tb, b_pad


def _mlp_kernel(x_ref, w1_ref, b1_ref, w2_ref, b2_ref, w3_ref, b3_ref, o_ref):
    """One batch tile of Linear -> ReLU -> Linear -> ReLU -> Linear.

    MXU inputs are bf16; accumulation, bias add and ReLU stay in f32.  ReLU and the
    bf16 down-cast are fused so only the bf16 activation lives between layers.
    """
    x = x_ref[...].astype(w1_ref.dtype)          # f32 -> bf16 in-VMEM (feeds MXU)

    # Layer 1: Linear + ReLU (fused down-cast)
    h1 = jnp.dot(x, w1_ref[...], preferred_element_type=jnp.float32)
    h1 = jnp.maximum(h1 + b1_ref[...], 0.0).astype(w2_ref.dtype)

    # Layer 2: Linear + ReLU (fused down-cast)
    h2 = jnp.dot(h1, w2_ref[...], preferred_element_type=jnp.float32)
    h2 = jnp.maximum(h2 + b2_ref[...], 0.0).astype(w3_ref.dtype)

    # Layer 3: Linear (logits)
    out = jnp.dot(h2, w3_ref[...], preferred_element_type=jnp.float32)
    o_ref[...] = (out + b3_ref[...]).astype(o_ref.dtype)


def prepare_params(w1, b1, w2, b2, w3, b3, compute_dtype=jnp.bfloat16):
    """One-time packing of PyTorch-style Linear params (W [out,in], b [out]).

    - transpose weights to [in, out] so the kernel computes plain x @ W
    - zero-pad every feature dim to a multiple of 128 (lane-dense MXU + stores).
      If hidden sizes are tunable, prefer multiples of 256: that fully fills the
      256x256 MXUs on v6e/v7x (128 already saturates v5e's 128x128 MXUs).
    - cast weights to bf16 for the MXU; biases stay f32 (f32 VPU math)
    """
    # TODO(synk): optional fp8 (e4m3) weight storage on v7x would double MXU
    # throughput and halve resident-weight VMEM/DMA bytes, if accuracy allows.
    def pack_w(w):
        out_f, in_f = w.shape
        wp = jnp.zeros((_round_up(in_f, _LANE), _round_up(out_f, _LANE)),
                       jnp.float32)
        wp = wp.at[:in_f, :out_f].set(w.T.astype(jnp.float32))
        return wp.astype(compute_dtype)

    def pack_b(b):
        out_f = b.shape[0]
        bp = jnp.zeros((1, _round_up(out_f, _LANE)), jnp.float32)
        return bp.at[0, :out_f].set(b.astype(jnp.float32))

    params = (pack_w(w1), pack_b(b1), pack_w(w2), pack_b(b2),
              pack_w(w3), pack_b(b3))
    return params, int(w3.shape[0])


@functools.partial(jax.jit, static_argnames=("num_classes", "single_buffer_weights"))
def mlp_forward(x, params, num_classes, single_buffer_weights=True):
    """x: [B, input_size] (f32). params: output of prepare_params()."""
    w1, b1, w2, b2, w3, b3 = params
    B, Din = x.shape
    Din_pad, H_pad = w1.shape
    C_pad = w3.shape[1]
    w_itemsize = w1.dtype.itemsize
    x_itemsize = x.dtype.itemsize
    weight_buffers = 1 if single_buffer_weights else 2

    # ---- VMEM budget (per TensorCore) -> per-chip batch tile -------------------
    capacity = _vmem_capacity_bytes()
    budget = int(0.8 * capacity)

    weight_bytes = weight_buffers * (
        (Din_pad * H_pad + H_pad * H_pad + H_pad * C_pad) * w_itemsize
        + (2 * H_pad + C_pad) * 4)
    if weight_bytes > 0.5 * capacity:
        # TODO(synk): tile the output-feature dim (extra grid axis) or pipeline
        # weight tiles with pltpu.emit_pipeline once the MLP outgrows VMEM.
        raise ValueError("MLP weights too large to stay VMEM-resident on this chip")

    max_tb = _SUBLANE_F32
    tb = _SUBLANE_F32
    while tb <= _MAX_TB:
        if (_vmem_footprint_bytes(tb, Din_pad, H_pad, C_pad, x_itemsize,
                                  w_itemsize, weight_buffers) * 1.2) <= budget:
            max_tb = tb
        tb *= 2

    TB, B_pad = _choose_tb(B, max_tb)
    num_tiles = B_pad // TB

    # x stays f32; only materialize a padded copy when padding is actually needed.
    if (B != B_pad) or (Din != Din_pad):
        x_in = jnp.zeros((B_pad, Din_pad), x.dtype).at[:B, :Din].set(x)
    else:
        x_in = x

    vmem_limit = int(min(
        capacity,
        max(1.25 * _vmem_footprint_bytes(TB, Din_pad, H_pad, C_pad, x_itemsize,
                                         w_itemsize, weight_buffers),
            32 * 1024 * 1024)))

    # Grid-invariant weights/biases: single-buffer them (no pointless double buffer).
    if single_buffer_weights:
        resident = lambda a: pl.BlockSpec(a.shape, lambda i: (0, 0),
                                          pipeline_mode=pl.Buffered(1))
    else:
        resident = lambda a: pl.BlockSpec(a.shape, lambda i: (0, 0))

    flops = 2 * B_pad * (Din_pad * H_pad + H_pad * H_pad + H_pad * C_pad)
    bytes_accessed = (x_in.size * x_itemsize
                      + sum(a.size * a.dtype.itemsize for a in params)
                      + B_pad * C_pad * 4)

    out_p = pl.pallas_call(
        _mlp_kernel,
        out_shape=jax.ShapeDtypeStruct((B_pad, C_pad), x.dtype),
        grid=(num_tiles,),
        in_specs=[
            pl.BlockSpec((TB, Din_pad), lambda i: (i, 0)),   # x tile per grid step
            resident(w1), resident(b1),                      # weights stay resident
            resident(w2), resident(b2),
            resident(w3), resident(b3),
        ],
        out_specs=pl.BlockSpec((TB, C_pad), lambda i: (i, 0)),
        compiler_params=pltpu.CompilerParams(
            dimension_semantics=("parallel",),
            vmem_limit_bytes=vmem_limit),
        cost_estimate=pl.CostEstimate(
            flops=flops, transcendentals=0, bytes_accessed=bytes_accessed),
    )(x_in, w1, b1, w2, b2, w3, b3)

    return out_p[:B, :num_classes]


def _reference_f32(x, w1, b1, w2, b2, w3, b3):
    h = jnp.maximum(x @ w1.T + b1, 0.0)
    h = jnp.maximum(h @ w2.T + b2, 0.0)
    return h @ w3.T + b3


def _reference_bf16(x, w1, b1, w2, b2, w3, b3):
    cd = jnp.bfloat16
    h = jnp.dot(x.astype(cd), w1.T.astype(cd),
                preferred_element_type=jnp.float32) + b1
    h = jnp.maximum(h, 0.0)
    h = jnp.dot(h.astype(cd), w2.T.astype(cd),
                preferred_element_type=jnp.float32) + b2
    h = jnp.maximum(h, 0.0)
    return jnp.dot(h.astype(cd), w3.T.astype(cd),
                   preferred_element_type=jnp.float32) + b3


if __name__ == "__main__":
    batch = 8
    input_size = 16
    hidden_size = 32
    num_classes = 10

    key = jax.random.PRNGKey(0)
    k = jax.random.split(key, 7)

    x = jax.random.normal(k[0], (batch, input_size), dtype=jnp.float32)

    # Deterministic parameter init (PyTorch Linear shapes: W [out, in], b [out]).
    def init_linear(kw, kb, fan_in, fan_out):
        bound = 1.0 / jnp.sqrt(fan_in)
        w = jax.random.uniform(kw, (fan_out, fan_in), minval=-bound, maxval=bound,
                               dtype=jnp.float32)
        b = jax.random.uniform(kb, (fan_out,), minval=-bound, maxval=bound,
                               dtype=jnp.float32)
        return w, b

    w1, b1 = init_linear(k[1], k[2], input_size, hidden_size)
    w2, b2 = init_linear(k[3], k[4], hidden_size, hidden_size)
    w3, b3 = init_linear(k[5], k[6], hidden_size, num_classes)

    # One-time packing (transpose / pad / bf16-cast) outside the forward path.
    params, n_cls = prepare_params(w1, b1, w2, b2, w3, b3)

    try:
        out = mlp_forward(x, params, num_classes=n_cls, single_buffer_weights=True)
        out = jax.block_until_ready(out)
    except Exception:
        # Fallback for jax versions without BlockSpec.pipeline_mode support:
        # identical kernel with default (double-buffered) resident weights.
        out = mlp_forward(x, params, num_classes=n_cls, single_buffer_weights=False)
        out = jax.block_until_ready(out)

    assert out.shape == (batch, num_classes)

    # Tight check against a bf16-input / f32-accumulate emulation of the kernel.
    ref_bf16 = _reference_bf16(x, w1, b1, w2, b2, w3, b3)
    assert jnp.allclose(out, ref_bf16, atol=1e-3, rtol=1e-3)

    # Loose sanity check against the full-f32 PyTorch-equivalent math.
    ref_f32 = _reference_f32(x, w1, b1, w2, b2, w3, b3)
    assert jnp.allclose(out, ref_f32, atol=5e-2, rtol=5e-2)

    print("KERNEL_OK")
</pallas_src>

<mosaic_0001>
module attributes {stable_mosaic.version = 11 : i64} {
  func.func @_mlp_kernel(%arg0: i32, %arg1: memref<8x128xf32, #tpu.memory_space<vmem>>, %arg2: memref<128x128xbf16, #tpu.memory_space<vmem>>, %arg3: memref<1x128xf32, #tpu.memory_space<vmem>>, %arg4: memref<128x128xbf16, #tpu.memory_space<vmem>>, %arg5: memref<1x128xf32, #tpu.memory_space<vmem>>, %arg6: memref<128x128xbf16, #tpu.memory_space<vmem>>, %arg7: memref<1x128xf32, #tpu.memory_space<vmem>>, %arg8: memref<8x128xf32, #tpu.memory_space<vmem>>) attributes {dimension_semantics = [#tpu.dimension_semantics<parallel>], iteration_bounds = array<i64: 1>, scalar_prefetch = 0 : i64, scratch_operands = 0 : i64, tpu.core_type = #tpu.core_type<tc>, window_params = [{transform_indices = @transform_0, window_bounds = array<i64: 8, 128>}, {pipeline_mode = #tpu.pipeline_mode<synchronous>, transform_indices = @transform_1, window_bounds = array<i64: 128, 128>}, {pipeline_mode = #tpu.pipeline_mode<synchronous>, transform_indices = @transform_2, window_bounds = array<i64: 1, 128>}, {pipeline_mode = #tpu.pipeline_mode<synchronous>, transform_indices = @transform_3, window_bounds = array<i64: 128, 128>}, {pipeline_mode = #tpu.pipeline_mode<synchronous>, transform_indices = @transform_4, window_bounds = array<i64: 1, 128>}, {pipeline_mode = #tpu.pipeline_mode<synchronous>, transform_indices = @transform_5, window_bounds = array<i64: 128, 128>}, {pipeline_mode = #tpu.pipeline_mode<synchronous>, transform_indices = @transform_6, window_bounds = array<i64: 1, 128>}, {transform_indices = @transform_7, window_bounds = array<i64: 8, 128>}]} {
    %c0 = arith.constant 0 : index
    %c0_0 = arith.constant 0 : index
    %0 = vector.load %arg1[%c0, %c0_0] : memref<8x128xf32, #tpu.memory_space<vmem>>, vector<8x128xf32>
    %1 = arith.truncf %0 : vector<8x128xf32> to vector<8x128xbf16>
    %c0_1 = arith.constant 0 : index
    %c0_2 = arith.constant 0 : index
    %2 = vector.load %arg2[%c0_1, %c0_2] : memref<128x128xbf16, #tpu.memory_space<vmem>>, vector<128x128xbf16>
    %cst = arith.constant dense<0.000000e+00> : vector<8x128xf32>
    %3 = tpu.matmul %1, %2, %cst {dimension_numbers = #tpu.dot_dimension_numbers<[1], [0], [0], [1], [0, 0, 1, 1], [], []>} : vector<8x128xbf16>, vector<128x128xbf16>, vector<8x128xf32> -> vector<8x128xf32>
    %c0_3 = arith.constant 0 : index
    %c0_4 = arith.constant 0 : index
    %4 = vector.load %arg3[%c0_3, %c0_4] : memref<1x128xf32, #tpu.memory_space<vmem>>, vector<1x128xf32>
    %5 = vector.broadcast %4 : vector<1x128xf32> to vector<8x128xf32>
    %6 = arith.addf %3, %5 : vector<8x128xf32>
    %cst_5 = arith.constant 0.000000e+00 : f32
    %7 = vector.broadcast %cst_5 : f32 to vector<8x128xf32>
    %8 = arith.maximumf %6, %7 : vector<8x128xf32>
    %9 = arith.truncf %8 : vector<8x128xf32> to vector<8x128xbf16>
    %c0_6 = arith.constant 0 : index
    %c0_7 = arith.constant 0 : index
    %10 = vector.load %arg4[%c0_6, %c0_7] : memref<128x128xbf16, #tpu.memory_space<vmem>>, vector<128x128xbf16>
    %cst_8 = arith.constant dense<0.000000e+00> : vector<8x128xf32>
    %11 = tpu.matmul %9, %10, %cst_8 {dimension_numbers = #tpu.dot_dimension_numbers<[1], [0], [0], [1], [0, 0, 1, 1], [], []>} : vector<8x128xbf16>, vector<128x128xbf16>, vector<8x128xf32> -> vector<8x128xf32>
    %c0_9 = arith.constant 0 : index
    %c0_10 = arith.constant 0 : index
    %12 = vector.load %arg5[%c0_9, %c0_10] : memref<1x128xf32, #tpu.memory_space<vmem>>, vector<1x128xf32>
    %13 = vector.broadcast %12 : vector<1x128xf32> to vector<8x128xf32>
    %14 = arith.addf %11, %13 : vector<8x128xf32>
    %cst_11 = arith.constant 0.000000e+00 : f32
    %15 = vector.broadcast %cst_11 : f32 to vector<8x128xf32>
    %16 = arith.maximumf %14, %15 : vector<8x128xf32>
    %17 = arith.truncf %16 : vector<8x128xf32> to vector<8x128xbf16>
    %c0_12 = arith.constant 0 : index
    %c0_13 = arith.constant 0 : index
    %18 = vector.load %arg6[%c0_12, %c0_13] : memref<128x128xbf16, #tpu.memory_space<vmem>>, vector<128x128xbf16>
    %cst_14 = arith.constant dense<0.000000e+00> : vector<8x128xf32>
    %19 = tpu.matmul %17, %18, %cst_14 {dimension_numbers = #tpu.dot_dimension_numbers<[1], [0], [0], [1], [0, 0, 1, 1], [], []>} : vector<8x128xbf16>, vector<128x128xbf16>, vector<8x128xf32> -> vector<8x128xf32>
    %c0_15 = arith.constant 0 : index
    %c0_16 = arith.constant 0 : index
    %20 = vector.load %arg7[%c0_15, %c0_16] : memref<1x128xf32, #tpu.memory_space<vmem>>, vector<1x128xf32>
    %21 = vector.broadcast %20 : vector<1x128xf32> to vector<8x128xf32>
    %22 = arith.addf %19, %21 : vector<8x128xf32>
    %c0_17 = arith.constant 0 : index
    %c0_18 = arith.constant 0 : index
    %23 = vector.load %arg8[%c0_17, %c0_18] : memref<8x128xf32, #tpu.memory_space<vmem>>, vector<8x128xf32>
    tpu.vector_store %arg8[%c0_17, %c0_18], %22 {strides = array<i32>} : memref<8x128xf32, #tpu.memory_space<vmem>>, vector<8x128xf32>,
    return
  }
  func.func @transform_0(%arg0: i32) -> (i32, i32) {
    %c0_i32 = arith.constant 0 : i32
    %c0_i32_0 = arith.constant 0 : i32
    return %arg0, %c0_i32 : i32, i32
  }
  func.func @transform_1(%arg0: i32) -> (i32, i32) {
    %c0_i32 = arith.constant 0 : i32
    %c0_i32_0 = arith.constant 0 : i32
    %c0_i32_1 = arith.constant 0 : i32
    return %c0_i32, %c0_i32_0 : i32, i32
  }
  func.func @transform_2(%arg0: i32) -> (i32, i32) {
    %c0_i32 = arith.constant 0 : i32
    %c0_i32_0 = arith.constant 0 : i32
    %c0_i32_1 = arith.constant 0 : i32
    return %c0_i32, %c0_i32_0 : i32, i32
  }
  func.func @transform_3(%arg0: i32) -> (i32, i32) {
    %c0_i32 = arith.constant 0 : i32
    %c0_i32_0 = arith.constant 0 : i32
    %c0_i32_1 = arith.constant 0 : i32
    return %c0_i32, %c0_i32_0 : i32, i32
  }
  func.func @transform_4(%arg0: i32) -> (i32, i32) {
    %c0_i32 = arith.constant 0 : i32
    %c0_i32_0 = arith.constant 0 : i32
    %c0_i32_1 = arith.constant 0 : i32
    return %c0_i32, %c0_i32_0 : i32, i32
  }
  func.func @transform_5(%arg0: i32) -> (i32, i32) {
    %c0_i32 = arith.constant 0 : i32
    %c0_i32_0 = arith.constant 0 : i32
    %c0_i32_1 = arith.constant 0 : i32
    return %c0_i32, %c0_i32_0 : i32, i32
  }
  func.func @transform_6(%arg0: i32) -> (i32, i32) {
    %c0_i32 = arith.constant 0 : i32
    %c0_i32_0 = arith.constant 0 : i32
    %c0_i32_1 = arith.constant 0 : i32
    return %c0_i32, %c0_i32_0 : i32, i32
  }
  func.func @transform_7(%arg0: i32) -> (i32, i32) {
    %c0_i32 = arith.constant 0 : i32
    %c0_i32_0 = arith.constant 0 : i32
    return %arg0, %c0_i32 : i32, i32
  }
}

module attributes {stable_mosaic.version = 11 : i64} {
  func.func @_mlp_kernel(%arg0: i32, %arg1: memref<8x128xf32, #tpu.memory_space<vmem>>, %arg2: memref<128x128xbf16, #tpu.memory_space<vmem>>, %arg3: memref<1x128xf32, #tpu.memory_space<vmem>>, %arg4: memref<128x128xbf16, #tpu.memory_space<vmem>>, %arg5: memref<1x128xf32, #tpu.memory_space<vmem>>, %arg6: memref<128x128xbf16, #tpu.memory_space<vmem>>, %arg7: memref<1x128xf32, #tpu.memory_space<vmem>>, %arg8: memref<8x128xf32, #tpu.memory_space<vmem>>) attributes {dimension_semantics = [#tpu.dimension_semantics<parallel>], iteration_bounds = array<i64: 1>, scalar_prefetch = 0 : i64, scratch_operands = 0 : i64, tpu.core_type = #tpu.core_type<tc>, window_params = [{transform_indices = @transform_0, window_bounds = array<i64: 8, 128>}, {pipeline_mode = #tpu.pipeline_mode<synchronous>, transform_indices = @transform_1, window_bounds = array<i64: 128, 128>}, {pipeline_mode = #tpu.pipeline_mode<synchronous>, transform_indices = @transform_2, window_bounds = array<i64: 1, 128>}, {pipeline_mode = #tpu.pipeline_mode<synchronous>, transform_indices = @transform_3, window_bounds = array<i64: 128, 128>}, {pipeline_mode = #tpu.pipeline_mode<synchronous>, transform_indices = @transform_4, window_bounds = array<i64: 1, 128>}, {pipeline_mode = #tpu.pipeline_mode<synchronous>, transform_indices = @transform_5, window_bounds = array<i64: 128, 128>}, {pipeline_mode = #tpu.pipeline_mode<synchronous>, transform_indices = @transform_6, window_bounds = array<i64: 1, 128>}, {transform_indices = @transform_7, window_bounds = array<i64: 8, 128>}]} {
    %c0 = arith.constant 0 : index
    %c0_0 = arith.constant 0 : index
    %0 = vector.load %arg1[%c0, %c0_0] : memref<8x128xf32, #tpu.memory_space<vmem>>, vector<8x128xf32>
    %1 = arith.truncf %0 : vector<8x128xf32> to vector<8x128xbf16>
    %c0_1 = arith.constant 0 : index
    %c0_2 = arith.constant 0 : index
    %2 = vector.load %arg2[%c0_1, %c0_2] : memref<128x128xbf16, #tpu.memory_space<vmem>>, vector<128x128xbf16>
    %cst = arith.constant dense<0.000000e+00> : vector<8x128xf32>
    %3 = tpu.matmul %1, %2, %cst {dimension_numbers = #tpu.dot_dimension_numbers<[1], [0], [0], [1], [0, 0, 1, 1], [], []>} : vector<8x128xbf16>, vector<128x128xbf16>, vector<8x128xf32> -> vector<8x128xf32>
    %c0_3 = arith.constant 0 : index
    %c0_4 = arith.constant 0 : index
    %4 = vector.load %arg3[%c0_3, %c0_4] : memref<1x128xf32, #tpu.memory_space<vmem>>, vector<1x128xf32>
    %5 = vector.broadcast %4 : vector<1x128xf32> to vector<8x128xf32>
    %6 = arith.addf %3, %5 : vector<8x128xf32>
    %cst_5 = arith.constant 0.000000e+00 : f32
    %7 = vector.broadcast %cst_5 : f32 to vector<8x128xf32>
    %8 = arith.maximumf %6, %7 : vector<8x128xf32>
    %9 = arith.truncf %8 : vector<8x128xf32> to vector<8x128xbf16>
    %c0_6 = arith.constant 0 : index
    %c0_7 = arith.constant 0 : index
    %10 = vector.load %arg4[%c0_6, %c0_7] : memref<128x128xbf16, #tpu.memory_space<vmem>>, vector<128x128xbf16>
    %cst_8 = arith.constant dense<0.000000e+00> : vector<8x128xf32>
    %11 = tpu.matmul %9, %10, %cst_8 {dimension_numbers = #tpu.dot_dimension_numbers<[1], [0], [0], [1], [0, 0, 1, 1], [], []>} : vector<8x128xbf16>, vector<128x128xbf16>, vector<8x128xf32> -> vector<8x128xf32>
    %c0_9 = arith.constant 0 : index
    %c0_10 = arith.constant 0 : index
    %12 = vector.load %arg5[%c0_9, %c0_10] : memref<1x128xf32, #tpu.memory_space<vmem>>, vector<1x128xf32>
    %13 = vector.broadcast %12 : vector<1x128xf32> to vector<8x128xf32>
    %14 = arith.addf %11, %13 : vector<8x128xf32>
    %cst_11 = arith.constant 0.000000e+00 : f32
    %15 = vector.broadcast %cst_11 : f32 to vector<8x128xf32>
    %16 = arith.maximumf %14, %15 : vector<8x128xf32>
    %17 = arith.truncf %16 : vector<8x128xf32> to vector<8x128xbf16>
    %c0_12 = arith.constant 0 : index
    %c0_13 = arith.constant 0 : index
    %18 = vector.load %arg6[%c0_12, %c0_13] : memref<128x128xbf16, #tpu.memory_space<vmem>>, vector<128x128xbf16>
    %cst_14 = arith.constant dense<0.000000e+00> : vector<8x128xf32>
    %19 = tpu.matmul %17, %18, %cst_14 {dimension_numbers = #tpu.dot_dimension_numbers<[1], [0], [0], [1], [0, 0, 1, 1], [], []>} : vector<8x128xbf16>, vector<128x128xbf16>, vector<8x128xf32> -> vector<8x128xf32>
    %c0_15 = arith.constant 0 : index
    %c0_16 = arith.constant 0 : index
    %20 = vector.load %arg7[%c0_15, %c0_16] : memref<1x128xf32, #tpu.memory_space<vmem>>, vector<1x128xf32>
    %21 = vector.broadcast %20 : vector<1x128xf32> to vector<8x128xf32>
    %22 = arith.addf %19, %21 : vector<8x128xf32>
    %c0_17 = arith.constant 0 : index
    %c0_18 = arith.constant 0 : index
    %23 = vector.load %arg8[%c0_17, %c0_18] : memref<8x128xf32, #tpu.memory_space<vmem>>, vector<8x128xf32>
    tpu.vector_store %arg8[%c0_17, %c0_18], %22 {strides = array<i32>} : memref<8x128xf32, #tpu.memory_space<vmem>>, vector<8x128xf32>,
    return
  }
  func.func @transform_0(%arg0: i32) -> (i32, i32) {
    %c0_i32 = arith.constant 0 : i32
    %c0_i32_0 = arith.constant 0 : i32
    return %arg0, %c0_i32 : i32, i32
  }
  func.func @transform_1(%arg0: i32) -> (i32, i32) {
    %c0_i32 = arith.constant 0 : i32
    %c0_i32_0 = arith.constant 0 : i32
    %c0_i32_1 = arith.constant 0 : i32
    return %c0_i32, %c0_i32_0 : i32, i32
  }
  func.func @transform_2(%arg0: i32) -> (i32, i32) {
    %c0_i32 = arith.constant 0 : i32
    %c0_i32_0 = arith.constant 0 : i32
    %c0_i32_1 = arith.constant 0 : i32
    return %c0_i32, %c0_i32_0 : i32, i32
  }
  func.func @transform_3(%arg0: i32) -> (i32, i32) {
    %c0_i32 = arith.constant 0 : i32
    %c0_i32_0 = arith.constant 0 : i32
    %c0_i32_1 = arith.constant 0 : i32
    return %c0_i32, %c0_i32_0 : i32, i32
  }
  func.func @transform_4(%arg0: i32) -> (i32, i32) {
    %c0_i32 = arith.constant 0 : i32
    %c0_i32_0 = arith.constant 0 : i32
    %c0_i32_1 = arith.constant 0 : i32
    return %c0_i32, %c0_i32_0 : i32, i32
  }
  func.func @transform_5(%arg0: i32) -> (i32, i32) {
    %c0_i32 = arith.constant 0 : i32
    %c0_i32_0 = arith.constant 0 : i32
    %c0_i32_1 = arith.constant 0 : i32
    return %c0_i32, %c0_i32_0 : i32, i32
  }
  func.func @transform_6(%arg0: i32) -> (i32, i32) {
    %c0_i32 = arith.constant 0 : i32
    %c0_i32_0 = arith.constant 0 : i32
    %c0_i32_1 = arith.constant 0 : i32
    return %c0_i32, %c0_i32_0 : i32, i32
  }
  func.func @transform_7(%arg0: i32) -> (i32, i32) {
    %c0_i32 = arith.constant 0 : i32
    %c0_i32_0 = arith.constant 0 : i32
    return %arg0, %c0_i32 : i32, i32
  }
}

</mosaic_0001>

<llo_original>
// kernel: mlp_forward.1
$region0: #{mlp_forward.1}
  #allocation0 [shape = 'u32[]', space=smem, size = 0x4, offset = 0x4, fixed_abs, tag = 'smem constant byte address 0x4 - core index']
  #allocation1 [shape = 'u32[144,128]{1,0:T(1,128)}', space=vmem, size = 0x12000, scoped, tag = 'internal scratch']
  %s0 = inlined_call_operand.vmem [shape: f32[8,128], index: 0, kind: input, shape index: {}]
  %s1 = inlined_call_operand.hbm [shape: bf16[128,128], index: 1, kind: input, shape index: {}]
  %s2 = inlined_call_operand.vmem [shape: f32[1,128], index: 2, kind: input, shape index: {}]
  %s3 = inlined_call_operand.hbm [shape: bf16[128,128], index: 3, kind: input, shape index: {}]
  %s4 = inlined_call_operand.vmem [shape: f32[1,128], index: 4, kind: input, shape index: {}]
  %s5 = inlined_call_operand.hbm [shape: bf16[128,128], index: 5, kind: input, shape index: {}]
  %s6 = inlined_call_operand.vmem [shape: f32[1,128], index: 6, kind: input, shape index: {}]
  %s7 = inlined_call_operand.hbm [shape: f32[8,128], index: 7, kind: output, shape index: {}]
  %s8 = sld [smem:[#allocation0]]
  $region50: #{mlp_forward.1} parent=0
    _
  %s10 = ssub.s32 1, %s8
  %s11 = scalar_select 0, %s10, %s8
  $region1: #{mlp_forward.1} parent=0
    #allocation2 [shape = 'u8[32768]{0}', space=vmem, size = 0x8000, scoped, tag = 'input window, operand 1, single buffered']
    #allocation3 [shape = 's32[1]{0}', space=sflag, size = 0x4, scoped, tag = 'scoped memory for mlp_forward.1']
    #allocation4 [shape = 's32[1]{0}', space=sflag, size = 0x4, scoped, tag = 'scoped memory for mlp_forward.1']
    #allocation5 [shape = 'u8[32768]{0}', space=vmem, size = 0x8000, scoped, tag = 'input window, operand 3, single buffered']
    #allocation6 [shape = 's32[1]{0}', space=sflag, size = 0x4, scoped, tag = 'scoped memory for mlp_forward.1']
    #allocation7 [shape = 'u8[32768]{0}', space=vmem, size = 0x8000, scoped, tag = 'input window, operand 5, single buffered']
    #allocation8 [shape = 'u8[4096]{0}', space=vmem, size = 0x1000, scoped, tag = 'output window, operand 0, single buffered']
    %12 = vsyncpa [#allocation3], 0
    %13 = vsyncpa [#allocation6], 0
    %14 = vsyncpa [#allocation4], 0
    // Predicated region
    $region2: #{mlp_forward.1} parent=1 // pred_check
      _
    $region3: #{mlp_forward.1} parent=1 // pred_check_branch
      %16 = sbr.rel (0) target = $region5
    $region4: #{mlp_forward.1} parent=1 // pred_region
      _
    $region5: #{mlp_forward.1} parent=1 // pred_fallthru
      _
    // Predicated region
    $region6: #{mlp_forward.1} parent=1 // pred_check
      _
    $region7: #{mlp_forward.1} parent=1 // pred_check_branch
      %18 = sbr.rel (0) target = $region9
    $region8: #{mlp_forward.1} parent=1 // pred_region
      %s20 = ssub.s32 1024, 1024
      %21 = vsyncadd [#allocation3], %s20
      %s22 = sshll.u32 [#allocation2], 4
      %s23 = int_to_ptr.vmem [resolvable:$true] %s22
      %28 = dma.hbm_to_vmem [thread:$0]  %s1, 1024, %s23, [#allocation3], 64, 64, 4
    $region9: #{mlp_forward.1} parent=1 // pred_fallthru
      _
    // Predicated region
    $region10: #{mlp_forward.1} parent=1 // pred_check
      _
    $region11: #{mlp_forward.1} parent=1 // pred_check_branch
      %30 = sbr.rel (0) target = $region13
    $region12: #{mlp_forward.1} parent=1 // pred_region
      _
    $region13: #{mlp_forward.1} parent=1 // pred_fallthru
      _
    // Predicated region
    $region14: #{mlp_forward.1} parent=1 // pred_check
      _
    $region15: #{mlp_forward.1} parent=1 // pred_check_branch
      %32 = sbr.rel (0) target = $region17
    $region16: #{mlp_forward.1} parent=1 // pred_region
      %s34 = ssub.s32 1024, 1024
      %35 = vsyncadd [#allocation6], %s34
      %s36 = sshll.u32 [#allocation5], 4
      %s37 = int_to_ptr.vmem [resolvable:$true] %s36
      %42 = dma.hbm_to_vmem [thread:$0]  %s3, 1024, %s37, [#allocation6], 64, 64, 4
    $region17: #{mlp_forward.1} parent=1 // pred_fallthru
      _
    // Predicated region
    $region18: #{mlp_forward.1} parent=1 // pred_check
      _
    $region19: #{mlp_forward.1} parent=1 // pred_check_branch
      %44 = sbr.rel (0) target = $region21
    $region20: #{mlp_forward.1} parent=1 // pred_region
      _
    $region21: #{mlp_forward.1} parent=1 // pred_fallthru
      _
    // Predicated region
    $region22: #{mlp_forward.1} parent=1 // pred_check
      _
    $region23: #{mlp_forward.1} parent=1 // pred_check_branch
      %46 = sbr.rel (0) target = $region25
    $region24: #{mlp_forward.1} parent=1 // pred_region
      %s48 = ssub.s32 1024, 1024
      %49 = vsyncadd [#allocation6], %s48
      %s50 = sshll.u32 [#allocation7], 4
      %s51 = int_to_ptr.vmem [resolvable:$true] %s50
      %56 = dma.hbm_to_vmem [thread:$0]  %s5, 1024, %s51, [#allocation6], 64, 64, 4
    $region25: #{mlp_forward.1} parent=1 // pred_fallthru
      _
    // Predicated region
    $region26: #{mlp_forward.1} parent=1 // pred_check
      _
    $region27: #{mlp_forward.1} parent=1 // pred_check_branch
      %58 = sbr.rel (0) target = $region29
    $region28: #{mlp_forward.1} parent=1 // pred_region
      _
    $region29: #{mlp_forward.1} parent=1 // pred_fallthru
      _
    // Predicated region
    $region30: #{mlp_forward.1} parent=1 // pred_check
      _
    $region31: #{mlp_forward.1} parent=1 // pred_check_branch
      %60 = sbr.rel (0) target = $region33
    $region32: #{mlp_forward.1} parent=1 // pred_region
      %61 = dma.done [#allocation3], 1024
    $region33: #{mlp_forward.1} parent=1 // pred_fallthru
      _
    // Predicated region
    $region34: #{mlp_forward.1} parent=1 // pred_check
      _
    $region35: #{mlp_forward.1} parent=1 // pred_check_branch
      %63 = sbr.rel (0) target = $region37
    $region36: #{mlp_forward.1} parent=1 // pred_region
      %64 = dma.done [#allocation6], 1024
    $region37: #{mlp_forward.1} parent=1 // pred_fallthru
      _
    // Predicated region
    $region38: #{mlp_forward.1} parent=1 // pred_check
      _
    $region39: #{mlp_forward.1} parent=1 // pred_check_branch
      %66 = sbr.rel (0) target = $region41
    $region40: #{mlp_forward.1} parent=1 // pred_region
      %67 = dma.done [#allocation6], 1024
    $region41: #{mlp_forward.1} parent=1 // pred_fallthru
      _
    %v69 = vld [vmem:[%s0] sm:$0xff]
    %v70 = vpack.c.bf16 %v69, %v69
    %v71 = vld [vmem:[#allocation2] sm:$0xf]
    %v72 = vld [vmem:[#allocation2 + $0x4] sm:$0xf]
    %v73 = vld [vmem:[#allocation2 + $0x8] sm:$0xf]
    %v74 = vld [vmem:[#allocation2 + $0xc] sm:$0xf]
    %v75 = vld [vmem:[#allocation2 + $0x10] sm:$0xf]
    %v76 = vld [vmem:[#allocation2 + $0x14] sm:$0xf]
    %v77 = vld [vmem:[#allocation2 + $0x18] sm:$0xf]
    %v78 = vld [vmem:[#allocation2 + $0x1c] sm:$0xf]
    %v79 = vld [vmem:[#allocation2 + $0x20] sm:$0xf]
    %v80 = vld [vmem:[#allocation2 + $0x24] sm:$0xf]
    %v81 = vld [vmem:[#allocation2 + $0x28] sm:$0xf]
    %v82 = vld [vmem:[#allocation2 + $0x2c] sm:$0xf]
    %v83 = vld [vmem:[#allocation2 + $0x30] sm:$0xf]
    %v84 = vld [vmem:[#allocation2 + $0x34] sm:$0xf]
    %v85 = vld [vmem:[#allocation2 + $0x38] sm:$0xf]
    %v86 = vld [vmem:[#allocation2 + $0x3c] sm:$0xf]
    %v87 = vld [vmem:[%s2] sm:$0x1]
    %v89 = vlaneseq
    %v90 = vshrl.u32 %v89, 7
    %v91 = vsub.s32 0, %v90
    %v92 = vrot.slane %v87, %v91
    %v110 = vunpack.c.l.b16 %v71
    %v111 = vunpack.c.l.b16 %v72
    %v112 = vunpack.c.l.b16 %v73
    %v113 = vunpack.c.l.b16 %v74
    %v114 = vunpack.c.l.b16 %v75
    %v115 = vunpack.c.l.b16 %v76
    %v116 = vunpack.c.l.b16 %v77
    %v117 = vunpack.c.l.b16 %v78
    %v118 = vunpack.c.l.b16 %v79
    %v119 = vunpack.c.l.b16 %v80
    %v120 = vunpack.c.l.b16 %v81
    %v121 = vunpack.c.l.b16 %v82
    %v122 = vunpack.c.l.b16 %v83
    %v123 = vunpack.c.l.b16 %v84
    %v124 = vunpack.c.l.b16 %v85
    %v125 = vunpack.c.l.b16 %v86
    %v126 = vpack.c.b16 %v111, %v110
    %v127 = vpack.c.b16 %v113, %v112
    %v128 = vpack.c.b16 %v115, %v114
    %v129 = vpack.c.b16 %v117, %v116
    %v130 = vpack.c.b16 %v119, %v118
    %v131 = vpack.c.b16 %v121, %v120
    %v132 = vpack.c.b16 %v123, %v122
    %v133 = vpack.c.b16 %v125, %v124
    %142 = vmatprep.subr.bf16.mxu0 0
    %143 = vmatpush1.bf16.msra.mxu0 %v126
    %144 = vmatprep.subr.bf16.mxu0 0
    %145 = vmatpush1.bf16.msra.mxu0 %v127
    %146 = vmatprep.subr.bf16.mxu0 0
    %147 = vmatpush1.bf16.msra.mxu0 %v128
    %148 = vmatprep.subr.bf16.mxu0 0
    %149 = vmatpush1.bf16.msra.mxu0 %v129
    %150 = vmatprep.subr.bf16.mxu0 0
    %151 = vmatpush1.bf16.msra.mxu0 %v130
    %152 = vmatprep.subr.bf16.mxu0 0
    %153 = vmatpush1.bf16.msra.mxu0 %v131
    %154 = vmatprep.subr.bf16.mxu0 0
    %155 = vmatpush1.bf16.msra.mxu0 %v132
    %156 = vmatprep.subr.bf16.mxu0 0
    %157 = vmatpush1.bf16.msra.mxu0 %v133
    %158 = vmatprep.subr.bf16.mxu0 0
    %159 = vmatpush1.bf16.msra.mxu0 0
    %160 = vmatprep.subr.bf16.mxu0 0
    %161 = vmatpush1.bf16.msra.mxu0 0
    %162 = vmatprep.subr.bf16.mxu0 0
    %163 = vmatpush1.bf16.msra.mxu0 0
    %164 = vmatprep.subr.bf16.mxu0 0
    %165 = vmatpush1.bf16.msra.mxu0 0
    %166 = vmatprep.subr.bf16.mxu0 0
    %167 = vmatpush1.bf16.msra.mxu0 0
    %168 = vmatprep.subr.bf16.mxu0 0
    %169 = vmatpush1.bf16.msra.mxu0 0
    %170 = vmatprep.subr.bf16.mxu0 0
    %171 = vmatpush1.bf16.msra.mxu0 0
    %172 = vmatprep.subr.bf16.mxu0 0
    %173 = vmatpush1.bf16.msra.mxu0 0
    %174 = vmatprep.mubr.bf16.mxu0 0
    %175 = vmatmul.mubr.bf16.gmra.mrb[0].mxu0 %v70
    %v176 = vpop.f32.mrb[0].mxu0
    %v177 = vadd.f32 %v92, %v176
    %v178 = vpop.f32.mrb[0].mxu0
    %v179 = vpop.f32.mrb[0].mxu0
    %v180 = vpop.f32.mrb[0].mxu0
    %181 = vdwg.mxu0
    %v182 = vmax.f32 %v177, 0.0
    %v183 = vpack.c.bf16 %v182, %v182
    %v184 = vld [vmem:[#allocation5] sm:$0xf]
    %v185 = vld [vmem:[#allocation5 + $0x4] sm:$0xf]
    %v186 = vld [vmem:[#allocation5 + $0x8] sm:$0xf]
    %v187 = vld [vmem:[#allocation5 + $0xc] sm:$0xf]
    %v188 = vld [vmem:[#allocation5 + $0x10] sm:$0xf]
    %v189 = vld [vmem:[#allocation5 + $0x14] sm:$0xf]
    %v190 = vld [vmem:[#allocation5 + $0x18] sm:$0xf]
    %v191 = vld [vmem:[#allocation5 + $0x1c] sm:$0xf]
    %v192 = vld [vmem:[#allocation5 + $0x20] sm:$0xf]
    %v193 = vld [vmem:[#allocation5 + $0x24] sm:$0xf]
    %v194 = vld [vmem:[#allocation5 + $0x28] sm:$0xf]
    %v195 = vld [vmem:[#allocation5 + $0x2c] sm:$0xf]
    %v196 = vld [vmem:[#allocation5 + $0x30] sm:$0xf]
    %v197 = vld [vmem:[#allocation5 + $0x34] sm:$0xf]
    %v198 = vld [vmem:[#allocation5 + $0x38] sm:$0xf]
    %v199 = vld [vmem:[#allocation5 + $0x3c] sm:$0xf]
    %v200 = vld [vmem:[%s4] sm:$0x1]
    %v202 = vlaneseq
    %v203 = vshrl.u32 %v202, 7
    %v204 = vsub.s32 0, %v203
    %v205 = vrot.slane %v200, %v204
    %v223 = vunpack.c.l.b16 %v184
    %v224 = vunpack.c.l.b16 %v185
    %v225 = vunpack.c.l.b16 %v186
    %v226 = vunpack.c.l.b16 %v187
    %v227 = vunpack.c.l.b16 %v188
    %v228 = vunpack.c.l.b16 %v189
    %v229 = vunpack.c.l.b16 %v190
    %v230 = vunpack.c.l.b16 %v191
    %v231 = vunpack.c.l.b16 %v192
    %v232 = vunpack.c.l.b16 %v193
    %v233 = vunpack.c.l.b16 %v194
    %v234 = vunpack.c.l.b16 %v195
    %v235 = vunpack.c.l.b16 %v196
    %v236 = vunpack.c.l.b16 %v197
    %v237 = vunpack.c.l.b16 %v198
    %v238 = vunpack.c.l.b16 %v199
    %v239 = vpack.c.b16 %v224, %v223
    %v240 = vpack.c.b16 %v226, %v225
    %v241 = vpack.c.b16 %v228, %v227
    %v242 = vpack.c.b16 %v230, %v229
    %v243 = vpack.c.b16 %v232, %v231
    %v244 = vpack.c.b16 %v234, %v233
    %v245 = vpack.c.b16 %v236, %v235
    %v246 = vpack.c.b16 %v238, %v237
    %255 = vmatprep.subr.bf16.mxu0 0
    %256 = vmatpush1.bf16.msra.mxu0 %v239
    %257 = vmatprep.subr.bf16.mxu0 0
    %258 = vmatpush1.bf16.msra.mxu0 %v240
    %259 = vmatprep.subr.bf16.mxu0 0
    %260 = vmatpush1.bf16.msra.mxu0 %v241
    %261 = vmatprep.subr.bf16.mxu0 0
    %262 = vmatpush1.bf16.msra.mxu0 %v242
    %263 = vmatprep.subr.bf16.mxu0 0
    %264 = vmatpush1.bf16.msra.mxu0 %v243
    %265 = vmatprep.subr.bf16.mxu0 0
    %266 = vmatpush1.bf16.msra.mxu0 %v244
    %267 = vmatprep.subr.bf16.mxu0 0
    %268 = vmatpush1.bf16.msra.mxu0 %v245
    %269 = vmatprep.subr.bf16.mxu0 0
    %270 = vmatpush1.bf16.msra.mxu0 %v246
    %271 = vmatprep.subr.bf16.mxu0 0
    %272 = vmatpush1.bf16.msra.mxu0 0
    %273 = vmatprep.subr.bf16.mxu0 0
    %274 = vmatpush1.bf16.msra.mxu0 0
    %275 = vmatprep.subr.bf16.mxu0 0
    %276 = vmatpush1.bf16.msra.mxu0 0
    %277 = vmatprep.subr.bf16.mxu0 0
    %278 = vmatpush1.bf16.msra.mxu0 0
    %279 = vmatprep.subr.bf16.mxu0 0
    %280 = vmatpush1.bf16.msra.mxu0 0
    %281 = vmatprep.subr.bf16.mxu0 0
    %282 = vmatpush1.bf16.msra.mxu0 0
    %283 = vmatprep.subr.bf16.mxu0 0
    %284 = vmatpush1.bf16.msra.mxu0 0
    %285 = vmatprep.subr.bf16.mxu0 0
    %286 = vmatpush1.bf16.msra.mxu0 0
    %287 = vmatprep.mubr.bf16.mxu0 0
    %288 = vmatmul.mubr.bf16.gmra.mrb[0].mxu0 %v183
    %v289 = vpop.f32.mrb[0].mxu0
    %v290 = vadd.f32 %v205, %v289
    %v291 = vpop.f32.mrb[0].mxu0
    %v292 = vpop.f32.mrb[0].mxu0
    %v293 = vpop.f32.mrb[0].mxu0
    %294 = vdwg.mxu0
    %v295 = vmax.f32 %v290, 0.0
    %v296 = vpack.c.bf16 %v295, %v295
    %v297 = vld [vmem:[#allocation7] sm:$0xf]
    %v298 = vld [vmem:[#allocation7 + $0x4] sm:$0xf]
    %v299 = vld [vmem:[#allocation7 + $0x8] sm:$0xf]
    %v300 = vld [vmem:[#allocation7 + $0xc] sm:$0xf]
    %v301 = vld [vmem:[#allocation7 + $0x10] sm:$0xf]
    %v302 = vld [vmem:[#allocation7 + $0x14] sm:$0xf]
    %v303 = vld [vmem:[#allocation7 + $0x18] sm:$0xf]
    %v304 = vld [vmem:[#allocation7 + $0x1c] sm:$0xf]
    %v305 = vld [vmem:[#allocation7 + $0x20] sm:$0xf]
    %v306 = vld [vmem:[#allocation7 + $0x24] sm:$0xf]
    %v307 = vld [vmem:[#allocation7 + $0x28] sm:$0xf]
    %v308 = vld [vmem:[#allocation7 + $0x2c] sm:$0xf]
    %v309 = vld [vmem:[#allocation7 + $0x30] sm:$0xf]
    %v310 = vld [vmem:[#allocation7 + $0x34] sm:$0xf]
    %v311 = vld [vmem:[#allocation7 + $0x38] sm:$0xf]
    %v312 = vld [vmem:[#allocation7 + $0x3c] sm:$0xf]
    %v313 = vld [vmem:[%s6] sm:$0x1]
    %v315 = vlaneseq
    %v316 = vshrl.u32 %v315, 7
    %v317 = vsub.s32 0, %v316
    %v318 = vrot.slane %v313, %v317
    %v336 = vunpack.c.l.b16 %v297
    %v337 = vunpack.c.l.b16 %v298
    %v338 = vunpack.c.l.b16 %v299
    %v339 = vunpack.c.l.b16 %v300
    %v340 = vunpack.c.l.b16 %v301
    %v341 = vunpack.c.l.b16 %v302
    %v342 = vunpack.c.l.b16 %v303
    %v343 = vunpack.c.l.b16 %v304
    %v344 = vunpack.c.l.b16 %v305
    %v345 = vunpack.c.l.b16 %v306
    %v346 = vunpack.c.l.b16 %v307
    %v347 = vunpack.c.l.b16 %v308
    %v348 = vunpack.c.l.b16 %v309
    %v349 = vunpack.c.l.b16 %v310
    %v350 = vunpack.c.l.b16 %v311
    %v351 = vunpack.c.l.b16 %v312
    %v352 = vpack.c.b16 %v337, %v336
    %v353 = vpack.c.b16 %v339, %v338
    %v354 = vpack.c.b16 %v341, %v340
    %v355 = vpack.c.b16 %v343, %v342
    %v356 = vpack.c.b16 %v345, %v344
    %v357 = vpack.c.b16 %v347, %v346
    %v358 = vpack.c.b16 %v349, %v348
    %v359 = vpack.c.b16 %v351, %v350
    %368 = vmatprep.subr.bf16.mxu0 0
    %369 = vmatpush1.bf16.msra.mxu0 %v352
    %370 = vmatprep.subr.bf16.mxu0 0
    %371 = vmatpush1.bf16.msra.mxu0 %v353
    %372 = vmatprep.subr.bf16.mxu0 0
    %373 = vmatpush1.bf16.msra.mxu0 %v354
    %374 = vmatprep.subr.bf16.mxu0 0
    %375 = vmatpush1.bf16.msra.mxu0 %v355
    %376 = vmatprep.subr.bf16.mxu0 0
    %377 = vmatpush1.bf16.msra.mxu0 %v356
    %378 = vmatprep.subr.bf16.mxu0 0
    %379 = vmatpush1.bf16.msra.mxu0 %v357
    %380 = vmatprep.subr.bf16.mxu0 0
    %381 = vmatpush1.bf16.msra.mxu0 %v358
    %382 = vmatprep.subr.bf16.mxu0 0
    %383 = vmatpush1.bf16.msra.mxu0 %v359
    %384 = vmatprep.subr.bf16.mxu0 0
    %385 = vmatpush1.bf16.msra.mxu0 0
    %386 = vmatprep.subr.bf16.mxu0 0
    %387 = vmatpush1.bf16.msra.mxu0 0
    %388 = vmatprep.subr.bf16.mxu0 0
    %389 = vmatpush1.bf16.msra.mxu0 0
    %390 = vmatprep.subr.bf16.mxu0 0
    %391 = vmatpush1.bf16.msra.mxu0 0
    %392 = vmatprep.subr.bf16.mxu0 0
    %393 = vmatpush1.bf16.msra.mxu0 0
    %394 = vmatprep.subr.bf16.mxu0 0
    %395 = vmatpush1.bf16.msra.mxu0 0
    %396 = vmatprep.subr.bf16.mxu0 0
    %397 = vmatpush1.bf16.msra.mxu0 0
    %398 = vmatprep.subr.bf16.mxu0 0
    %399 = vmatpush1.bf16.msra.mxu0 0
    %400 = vmatprep.mubr.bf16.mxu0 0
    %401 = vmatmul.mubr.bf16.gmra.mrb[0].mxu0 %v296
    %v402 = vpop.f32.mrb[0].mxu0
    %v403 = vadd.f32 %v318, %v402
    %v404 = vpop.f32.mrb[0].mxu0
    %v405 = vpop.f32.mrb[0].mxu0
    %v406 = vpop.f32.mrb[0].mxu0
    %407 = vdwg.mxu0
    %408 = vst [vmem:[#allocation8] sm:$0xff] %v403
    // Predicated region
    $region42: #{mlp_forward.1} parent=1 // pred_check
      _
    $region43: #{mlp_forward.1} parent=1 // pred_check_branch
      %410 = sbr.rel (0) target = $region45
    $region44: #{mlp_forward.1} parent=1 // pred_region
      %s412 = ssub.s32 128, 128
      %413 = vsyncadd [#allocation4], %s412
      %s415 = sshll.u32 [#allocation8], 4
      %s416 = int_to_ptr.vmem [resolvable:$true] %s415
      %418 = dma.vmem_to_hbm [thread:$0]  %s416, 128, %s7, [#allocation4]
    $region45: #{mlp_forward.1} parent=1 // pred_fallthru
      _
    // Predicated region
    $region46: #{mlp_forward.1} parent=1 // pred_check
      _
    $region47: #{mlp_forward.1} parent=1 // pred_check_branch
      %420 = sbr.rel (0) target = $region49
    $region48: #{mlp_forward.1} parent=1 // pred_region
      %421 = dma.done [#allocation4], 128
    $region49: #{mlp_forward.1} parent=1 // pred_fallthru
      _
    %422 = vsyncpa [#allocation3], 1
    %423 = vsyncpa [#allocation6], 1
    %424 = vsyncpa [#allocation4], 1

// kernel: mlp_forward.1
$region0: #{mlp_forward.1}
  #allocation0 [shape = 'u32[]', space=smem, size = 0x4, offset = 0x4, fixed_abs, tag = 'smem constant byte address 0x4 - core index']
  #allocation1 [shape = 'u32[144,128]{1,0:T(1,128)}', space=vmem, size = 0x12000, scoped, tag = 'internal scratch']
  %s0 = inlined_call_operand.vmem [shape: f32[8,128], index: 0, kind: input, shape index: {}]
  %s1 = inlined_call_operand.hbm [shape: bf16[128,128], index: 1, kind: input, shape index: {}]
  %s2 = inlined_call_operand.vmem [shape: f32[1,128], index: 2, kind: input, shape index: {}]
  %s3 = inlined_call_operand.hbm [shape: bf16[128,128], index: 3, kind: input, shape index: {}]
  %s4 = inlined_call_operand.vmem [shape: f32[1,128], index: 4, kind: input, shape index: {}]
  %s5 = inlined_call_operand.hbm [shape: bf16[128,128], index: 5, kind: input, shape index: {}]
  %s6 = inlined_call_operand.vmem [shape: f32[1,128], index: 6, kind: input, shape index: {}]
  %s7 = inlined_call_operand.hbm [shape: f32[8,128], index: 7, kind: output, shape index: {}]
  %s8 = sld [smem:[#allocation0]]
  $region50: #{mlp_forward.1} parent=0
    _
  %s10 = ssub.s32 1, %s8
  %s11 = scalar_select 0, %s10, %s8
  $region1: #{mlp_forward.1} parent=0
    #allocation2 [shape = 'u8[32768]{0}', space=vmem, size = 0x8000, scoped, tag = 'input window, operand 1, single buffered']
    #allocation3 [shape = 's32[1]{0}', space=sflag, size = 0x4, scoped, tag = 'scoped memory for mlp_forward.1']
    #allocation4 [shape = 's32[1]{0}', space=sflag, size = 0x4, scoped, tag = 'scoped memory for mlp_forward.1']
    #allocation5 [shape = 'u8[32768]{0}', space=vmem, size = 0x8000, scoped, tag = 'input window, operand 3, single buffered']
    #allocation6 [shape = 's32[1]{0}', space=sflag, size = 0x4, scoped, tag = 'scoped memory for mlp_forward.1']
    #allocation7 [shape = 'u8[32768]{0}', space=vmem, size = 0x8000, scoped, tag = 'input window, operand 5, single buffered']
    #allocation8 [shape = 'u8[4096]{0}', space=vmem, size = 0x1000, scoped, tag = 'output window, operand 0, single buffered']
    %12 = vsyncpa [#allocation3], 0
    %13 = vsyncpa [#allocation6], 0
    %14 = vsyncpa [#allocation4], 0
    // Predicated region
    $region2: #{mlp_forward.1} parent=1 // pred_check
      _
    $region3: #{mlp_forward.1} parent=1 // pred_check_branch
      %16 = sbr.rel (0) target = $region5
    $region4: #{mlp_forward.1} parent=1 // pred_region
      _
    $region5: #{mlp_forward.1} parent=1 // pred_fallthru
      _
    // Predicated region
    $region6: #{mlp_forward.1} parent=1 // pred_check
      _
    $region7: #{mlp_forward.1} parent=1 // pred_check_branch
      %18 = sbr.rel (0) target = $region9
    $region8: #{mlp_forward.1} parent=1 // pred_region
      %s20 = ssub.s32 1024, 1024
      %21 = vsyncadd [#allocation3], %s20
      %s22 = sshll.u32 [#allocation2], 4
      %s23 = int_to_ptr.vmem [resolvable:$true] %s22
      %28 = dma.hbm_to_vmem [thread:$0]  %s1, 1024, %s23, [#allocation3], 64, 64, 4
    $region9: #{mlp_forward.1} parent=1 // pred_fallthru
      _
    // Predicated region
    $region10: #{mlp_forward.1} parent=1 // pred_check
      _
    $region11: #{mlp_forward.1} parent=1 // pred_check_branch
      %30 = sbr.rel (0) target = $region13
    $region12: #{mlp_forward.1} parent=1 // pred_region
      _
    $region13: #{mlp_forward.1} parent=1 // pred_fallthru
      _
    // Predicated region
    $region14: #{mlp_forward.1} parent=1 // pred_check
      _
    $region15: #{mlp_forward.1} parent=1 // pred_check_branch
      %32 = sbr.rel (0) target = $region17
    $region16: #{mlp_forward.1} parent=1 // pred_region
      %s34 = ssub.s32 1024, 1024
      %35 = vsyncadd [#allocation6], %s34
      %s36 = sshll.u32 [#allocation5], 4
      %s37 = int_to_ptr.vmem [resolvable:$true] %s36
      %42 = dma.hbm_to_vmem [thread:$0]  %s3, 1024, %s37, [#allocation6], 64, 64, 4
    $region17: #{mlp_forward.1} parent=1 // pred_fallthru
      _
    // Predicated region
    $region18: #{mlp_forward.1} parent=1 // pred_check
      _
    $region19: #{mlp_forward.1} parent=1 // pred_check_branch
      %44 = sbr.rel (0) target = $region21
    $region20: #{mlp_forward.1} parent=1 // pred_region
      _
    $region21: #{mlp_forward.1} parent=1 // pred_fallthru
      _
    // Predicated region
    $region22: #{mlp_forward.1} parent=1 // pred_check
      _
    $region23: #{mlp_forward.1} parent=1 // pred_check_branch
      %46 = sbr.rel (0) target = $region25
    $region24: #{mlp_forward.1} parent=1 // pred_region
      %s48 = ssub.s32 1024, 1024
      %49 = vsyncadd [#allocation6], %s48
      %s50 = sshll.u32 [#allocation7], 4
      %s51 = int_to_ptr.vmem [resolvable:$true] %s50
      %56 = dma.hbm_to_vmem [thread:$0]  %s5, 1024, %s51, [#allocation6], 64, 64, 4
    $region25: #{mlp_forward.1} parent=1 // pred_fallthru
      _
    // Predicated region
    $region26: #{mlp_forward.1} parent=1 // pred_check
      _
    $region27: #{mlp_forward.1} parent=1 // pred_check_branch
      %58 = sbr.rel (0) target = $region29
    $region28: #{mlp_forward.1} parent=1 // pred_region
      _
    $region29: #{mlp_forward.1} parent=1 // pred_fallthru
      _
    // Predicated region
    $region30: #{mlp_forward.1} parent=1 // pred_check
      _
    $region31: #{mlp_forward.1} parent=1 // pred_check_branch
      %60 = sbr.rel (0) target = $region33
    $region32: #{mlp_forward.1} parent=1 // pred_region
      %61 = dma.done [#allocation3], 1024
    $region33: #{mlp_forward.1} parent=1 // pred_fallthru
      _
    // Predicated region
    $region34: #{mlp_forward.1} parent=1 // pred_check
      _
    $region35: #{mlp_forward.1} parent=1 // pred_check_branch
      %63 = sbr.rel (0) target = $region37
    $region36: #{mlp_forward.1} parent=1 // pred_region
      %64 = dma.done [#allocation6], 1024
    $region37: #{mlp_forward.1} parent=1 // pred_fallthru
      _
    // Predicated region
    $region38: #{mlp_forward.1} parent=1 // pred_check
      _
    $region39: #{mlp_forward.1} parent=1 // pred_check_branch
      %66 = sbr.rel (0) target = $region41
    $region40: #{mlp_forward.1} parent=1 // pred_region
      %67 = dma.done [#allocation6], 1024
    $region41: #{mlp_forward.1} parent=1 // pred_fallthru
      _
    %v69 = vld [vmem:[%s0] sm:$0xff]
    %v70 = vpack.c.bf16 %v69, %v69
    %v71 = vld [vmem:[#allocation2] sm:$0xf]
    %v72 = vld [vmem:[#allocation2 + $0x4] sm:$0xf]
    %v73 = vld [vmem:[#allocation2 + $0x8] sm:$0xf]
    %v74 = vld [vmem:[#allocation2 + $0xc] sm:$0xf]
    %v75 = vld [vmem:[#allocation2 + $0x10] sm:$0xf]
    %v76 = vld [vmem:[#allocation2 + $0x14] sm:$0xf]
    %v77 = vld [vmem:[#allocation2 + $0x18] sm:$0xf]
    %v78 = vld [vmem:[#allocation2 + $0x1c] sm:$0xf]
    %v79 = vld [vmem:[#allocation2 + $0x20] sm:$0xf]
    %v80 = vld [vmem:[#allocation2 + $0x24] sm:$0xf]
    %v81 = vld [vmem:[#allocation2 + $0x28] sm:$0xf]
    %v82 = vld [vmem:[#allocation2 + $0x2c] sm:$0xf]
    %v83 = vld [vmem:[#allocation2 + $0x30] sm:$0xf]
    %v84 = vld [vmem:[#allocation2 + $0x34] sm:$0xf]
    %v85 = vld [vmem:[#allocation2 + $0x38] sm:$0xf]
    %v86 = vld [vmem:[#allocation2 + $0x3c] sm:$0xf]
    %v87 = vld [vmem:[%s2] sm:$0x1]
    %v89 = vlaneseq
    %v90 = vshrl.u32 %v89, 7
    %v91 = vsub.s32 0, %v90
    %v92 = vrot.slane %v87, %v91
    %v110 = vunpack.c.l.b16 %v71
    %v111 = vunpack.c.l.b16 %v72
    %v112 = vunpack.c.l.b16 %v73
    %v113 = vunpack.c.l.b16 %v74
    %v114 = vunpack.c.l.b16 %v75
    %v115 = vunpack.c.l.b16 %v76
    %v116 = vunpack.c.l.b16 %v77
    %v117 = vunpack.c.l.b16 %v78
    %v118 = vunpack.c.l.b16 %v79
    %v119 = vunpack.c.l.b16 %v80
    %v120 = vunpack.c.l.b16 %v81
    %v121 = vunpack.c.l.b16 %v82
    %v122 = vunpack.c.l.b16 %v83
    %v123 = vunpack.c.l.b16 %v84
    %v124 = vunpack.c.l.b16 %v85
    %v125 = vunpack.c.l.b16 %v86
    %v126 = vpack.c.b16 %v111, %v110
    %v127 = vpack.c.b16 %v113, %v112
    %v128 = vpack.c.b16 %v115, %v114
    %v129 = vpack.c.b16 %v117, %v116
    %v130 = vpack.c.b16 %v119, %v118
    %v131 = vpack.c.b16 %v121, %v120
    %v132 = vpack.c.b16 %v123, %v122
    %v133 = vpack.c.b16 %v125, %v124
    %142 = vmatprep.subr.bf16.mxu0 0
    %143 = vmatpush1.bf16.msra.mxu0 %v126
    %144 = vmatprep.subr.bf16.mxu0 0
    %145 = vmatpush1.bf16.msra.mxu0 %v127
    %146 = vmatprep.subr.bf16.mxu0 0
    %147 = vmatpush1.bf16.msra.mxu0 %v128
    %148 = vmatprep.subr.bf16.mxu0 0
    %149 = vmatpush1.bf16.msra.mxu0 %v129
    %150 = vmatprep.subr.bf16.mxu0 0
    %151 = vmatpush1.bf16.msra.mxu0 %v130
    %152 = vmatprep.subr.bf16.mxu0 0
    %153 = vmatpush1.bf16.msra.mxu0 %v131
    %154 = vmatprep.subr.bf16.mxu0 0
    %155 = vmatpush1.bf16.msra.mxu0 %v132
    %156 = vmatprep.subr.bf16.mxu0 0
    %157 = vmatpush1.bf16.msra.mxu0 %v133
    %158 = vmatprep.subr.bf16.mxu0 0
    %159 = vmatpush1.bf16.msra.mxu0 0
    %160 = vmatprep.subr.bf16.mxu0 0
    %161 = vmatpush1.bf16.msra.mxu0 0
    %162 = vmatprep.subr.bf16.mxu0 0
    %163 = vmatpush1.bf16.msra.mxu0 0
    %164 = vmatprep.subr.bf16.mxu0 0
    %165 = vmatpush1.bf16.msra.mxu0 0
    %166 = vmatprep.subr.bf16.mxu0 0
    %167 = vmatpush1.bf16.msra.mxu0 0
    %168 = vmatprep.subr.bf16.mxu0 0
    %169 = vmatpush1.bf16.msra.mxu0 0
    %170 = vmatprep.subr.bf16.mxu0 0
    %171 = vmatpush1.bf16.msra.mxu0 0
    %172 = vmatprep.subr.bf16.mxu0 0
    %173 = vmatpush1.bf16.msra.mxu0 0
    %174 = vmatprep.mubr.bf16.mxu0 0
    %175 = vmatmul.mubr.bf16.gmra.mrb[0].mxu0 %v70
    %v176 = vpop.f32.mrb[0].mxu0
    %v177 = vadd.f32 %v92, %v176
    %v178 = vpop.f32.mrb[0].mxu0
    %v179 = vpop.f32.mrb[0].mxu0
    %v180 = vpop.f32.mrb[0].mxu0
    %181 = vdwg.mxu0
    %v182 = vmax.f32 %v177, 0.0
    %v183 = vpack.c.bf16 %v182, %v182
    %v184 = vld [vmem:[#allocation5] sm:$0xf]
    %v185 = vld [vmem:[#allocation5 + $0x4] sm:$0xf]
    %v186 = vld [vmem:[#allocation5 + $0x8] sm:$0xf]
    %v187 = vld [vmem:[#allocation5 + $0xc] sm:$0xf]
    %v188 = vld [vmem:[#allocation5 + $0x10] sm:$0xf]
    %v189 = vld [vmem:[#allocation5 + $0x14] sm:$0xf]
    %v190 = vld [vmem:[#allocation5 + $0x18] sm:$0xf]
    %v191 = vld [vmem:[#allocation5 + $0x1c] sm:$0xf]
    %v192 = vld [vmem:[#allocation5 + $0x20] sm:$0xf]
    %v193 = vld [vmem:[#allocation5 + $0x24] sm:$0xf]
    %v194 = vld [vmem:[#allocation5 + $0x28] sm:$0xf]
    %v195 = vld [vmem:[#allocation5 + $0x2c] sm:$0xf]
    %v196 = vld [vmem:[#allocation5 + $0x30] sm:$0xf]
    %v197 = vld [vmem:[#allocation5 + $0x34] sm:$0xf]
    %v198 = vld [vmem:[#allocation5 + $0x38] sm:$0xf]
    %v199 = vld [vmem:[#allocation5 + $0x3c] sm:$0xf]
    %v200 = vld [vmem:[%s4] sm:$0x1]
    %v202 = vlaneseq
    %v203 = vshrl.u32 %v202, 7
    %v204 = vsub.s32 0, %v203
    %v205 = vrot.slane %v200, %v204
    %v223 = vunpack.c.l.b16 %v184
    %v224 = vunpack.c.l.b16 %v185
    %v225 = vunpack.c.l.b16 %v186
    %v226 = vunpack.c.l.b16 %v187
    %v227 = vunpack.c.l.b16 %v188
    %v228 = vunpack.c.l.b16 %v189
    %v229 = vunpack.c.l.b16 %v190
    %v230 = vunpack.c.l.b16 %v191
    %v231 = vunpack.c.l.b16 %v192
    %v232 = vunpack.c.l.b16 %v193
    %v233 = vunpack.c.l.b16 %v194
    %v234 = vunpack.c.l.b16 %v195
    %v235 = vunpack.c.l.b16 %v196
    %v236 = vunpack.c.l.b16 %v197
    %v237 = vunpack.c.l.b16 %v198
    %v238 = vunpack.c.l.b16 %v199
    %v239 = vpack.c.b16 %v224, %v223
    %v240 = vpack.c.b16 %v226, %v225
    %v241 = vpack.c.b16 %v228, %v227
    %v242 = vpack.c.b16 %v230, %v229
    %v243 = vpack.c.b16 %v232, %v231
    %v244 = vpack.c.b16 %v234, %v233
    %v245 = vpack.c.b16 %v236, %v235
    %v246 = vpack.c.b16 %v238, %v237
    %255 = vmatprep.subr.bf16.mxu0 0
    %256 = vmatpush1.bf16.msra.mxu0 %v239
    %257 = vmatprep.subr.bf16.mxu0 0
    %258 = vmatpush1.bf16.msra.mxu0 %v240
    %259 = vmatprep.subr.bf16.mxu0 0
    %260 = vmatpush1.bf16.msra.mxu0 %v241
    %261 = vmatprep.subr.bf16.mxu0 0
    %262 = vmatpush1.bf16.msra.mxu0 %v242
    %263 = vmatprep.subr.bf16.mxu0 0
    %264 = vmatpush1.bf16.msra.mxu0 %v243
    %265 = vmatprep.subr.bf16.mxu0 0
    %266 = vmatpush1.bf16.msra.mxu0 %v244
    %267 = vmatprep.subr.bf16.mxu0 0
    %268 = vmatpush1.bf16.msra.mxu0 %v245
    %269 = vmatprep.subr.bf16.mxu0 0
    %270 = vmatpush1.bf16.msra.mxu0 %v246
    %271 = vmatprep.subr.bf16.mxu0 0
    %272 = vmatpush1.bf16.msra.mxu0 0
    %273 = vmatprep.subr.bf16.mxu0 0
    %274 = vmatpush1.bf16.msra.mxu0 0
    %275 = vmatprep.subr.bf16.mxu0 0
    %276 = vmatpush1.bf16.msra.mxu0 0
    %277 = vmatprep.subr.bf16.mxu0 0
    %278 = vmatpush1.bf16.msra.mxu0 0
    %279 = vmatprep.subr.bf16.mxu0 0
    %280 = vmatpush1.bf16.msra.mxu0 0
    %281 = vmatprep.subr.bf16.mxu0 0
    %282 = vmatpush1.bf16.msra.mxu0 0
    %283 = vmatprep.subr.bf16.mxu0 0
    %284 = vmatpush1.bf16.msra.mxu0 0
    %285 = vmatprep.subr.bf16.mxu0 0
    %286 = vmatpush1.bf16.msra.mxu0 0
    %287 = vmatprep.mubr.bf16.mxu0 0
    %288 = vmatmul.mubr.bf16.gmra.mrb[0].mxu0 %v183
    %v289 = vpop.f32.mrb[0].mxu0
    %v290 = vadd.f32 %v205, %v289
    %v291 = vpop.f32.mrb[0].mxu0
    %v292 = vpop.f32.mrb[0].mxu0
    %v293 = vpop.f32.mrb[0].mxu0
    %294 = vdwg.mxu0
    %v295 = vmax.f32 %v290, 0.0
    %v296 = vpack.c.bf16 %v295, %v295
    %v297 = vld [vmem:[#allocation7] sm:$0xf]
    %v298 = vld [vmem:[#allocation7 + $0x4] sm:$0xf]
    %v299 = vld [vmem:[#allocation7 + $0x8] sm:$0xf]
    %v300 = vld [vmem:[#allocation7 + $0xc] sm:$0xf]
    %v301 = vld [vmem:[#allocation7 + $0x10] sm:$0xf]
    %v302 = vld [vmem:[#allocation7 + $0x14] sm:$0xf]
    %v303 = vld [vmem:[#allocation7 + $0x18] sm:$0xf]
    %v304 = vld [vmem:[#allocation7 + $0x1c] sm:$0xf]
    %v305 = vld [vmem:[#allocation7 + $0x20] sm:$0xf]
    %v306 = vld [vmem:[#allocation7 + $0x24] sm:$0xf]
    %v307 = vld [vmem:[#allocation7 + $0x28] sm:$0xf]
    %v308 = vld [vmem:[#allocation7 + $0x2c] sm:$0xf]
    %v309 = vld [vmem:[#allocation7 + $0x30] sm:$0xf]
    %v310 = vld [vmem:[#allocation7 + $0x34] sm:$0xf]
    %v311 = vld [vmem:[#allocation7 + $0x38] sm:$0xf]
    %v312 = vld [vmem:[#allocation7 + $0x3c] sm:$0xf]
    %v313 = vld [vmem:[%s6] sm:$0x1]
    %v315 = vlaneseq
    %v316 = vshrl.u32 %v315, 7
    %v317 = vsub.s32 0, %v316
    %v318 = vrot.slane %v313, %v317
    %v336 = vunpack.c.l.b16 %v297
    %v337 = vunpack.c.l.b16 %v298
    %v338 = vunpack.c.l.b16 %v299
    %v339 = vunpack.c.l.b16 %v300
    %v340 = vunpack.c.l.b16 %v301
    %v341 = vunpack.c.l.b16 %v302
    %v342 = vunpack.c.l.b16 %v303
    %v343 = vunpack.c.l.b16 %v304
    %v344 = vunpack.c.l.b16 %v305
    %v345 = vunpack.c.l.b16 %v306
    %v346 = vunpack.c.l.b16 %v307
    %v347 = vunpack.c.l.b16 %v308
    %v348 = vunpack.c.l.b16 %v309
    %v349 = vunpack.c.l.b16 %v310
    %v350 = vunpack.c.l.b16 %v311
    %v351 = vunpack.c.l.b16 %v312
    %v352 = vpack.c.b16 %v337, %v336
    %v353 = vpack.c.b16 %v339, %v338
    %v354 = vpack.c.b16 %v341, %v340
    %v355 = vpack.c.b16 %v343, %v342
    %v356 = vpack.c.b16 %v345, %v344
    %v357 = vpack.c.b16 %v347, %v346
    %v358 = vpack.c.b16 %v349, %v348
    %v359 = vpack.c.b16 %v351, %v350
    %368 = vmatprep.subr.bf16.mxu0 0
    %369 = vmatpush1.bf16.msra.mxu0 %v352
    %370 = vmatprep.subr.bf16.mxu0 0
    %371 = vmatpush1.bf16.msra.mxu0 %v353
    %372 = vmatprep.subr.bf16.mxu0 0
    %373 = vmatpush1.bf16.msra.mxu0 %v354
    %374 = vmatprep.subr.bf16.mxu0 0
    %375 = vmatpush1.bf16.msra.mxu0 %v355
    %376 = vmatprep.subr.bf16.mxu0 0
    %377 = vmatpush1.bf16.msra.mxu0 %v356
    %378 = vmatprep.subr.bf16.mxu0 0
    %379 = vmatpush1.bf16.msra.mxu0 %v357
    %380 = vmatprep.subr.bf16.mxu0 0
    %381 = vmatpush1.bf16.msra.mxu0 %v358
    %382 = vmatprep.subr.bf16.mxu0 0
    %383 = vmatpush1.bf16.msra.mxu0 %v359
    %384 = vmatprep.subr.bf16.mxu0 0
    %385 = vmatpush1.bf16.msra.mxu0 0
    %386 = vmatprep.subr.bf16.mxu0 0
    %387 = vmatpush1.bf16.msra.mxu0 0
    %388 = vmatprep.subr.bf16.mxu0 0
    %389 = vmatpush1.bf16.msra.mxu0 0
    %390 = vmatprep.subr.bf16.mxu0 0
    %391 = vmatpush1.bf16.msra.mxu0 0
    %392 = vmatprep.subr.bf16.mxu0 0
    %393 = vmatpush1.bf16.msra.mxu0 0
    %394 = vmatprep.subr.bf16.mxu0 0
    %395 = vmatpush1.bf16.msra.mxu0 0
    %396 = vmatprep.subr.bf16.mxu0 0
    %397 = vmatpush1.bf16.msra.mxu0 0
    %398 = vmatprep.subr.bf16.mxu0 0
    %399 = vmatpush1.bf16.msra.mxu0 0
    %400 = vmatprep.mubr.bf16.mxu0 0
    %401 = vmatmul.mubr.bf16.gmra.mrb[0].mxu0 %v296
    %v402 = vpop.f32.mrb[0].mxu0
    %v403 = vadd.f32 %v318, %v402
    %v404 = vpop.f32.mrb[0].mxu0
    %v405 = vpop.f32.mrb[0].mxu0
    %v406 = vpop.f32.mrb[0].mxu0
    %407 = vdwg.mxu0
    %408 = vst [vmem:[#allocation8] sm:$0xff] %v403
    // Predicated region
    $region42: #{mlp_forward.1} parent=1 // pred_check
      _
    $region43: #{mlp_forward.1} parent=1 // pred_check_branch
      %410 = sbr.rel (0) target = $region45
    $region44: #{mlp_forward.1} parent=1 // pred_region
      %s412 = ssub.s32 128, 128
      %413 = vsyncadd [#allocation4], %s412
      %s415 = sshll.u32 [#allocation8], 4
      %s416 = int_to_ptr.vmem [resolvable:$true] %s415
      %418 = dma.vmem_to_hbm [thread:$0]  %s416, 128, %s7, [#allocation4]
    $region45: #{mlp_forward.1} parent=1 // pred_fallthru
      _
    // Predicated region
    $region46: #{mlp_forward.1} parent=1 // pred_check
      _
    $region47: #{mlp_forward.1} parent=1 // pred_check_branch
      %420 = sbr.rel (0) target = $region49
    $region48: #{mlp_forward.1} parent=1 // pred_region
      %421 = dma.done [#allocation4], 128
    $region49: #{mlp_forward.1} parent=1 // pred_fallthru
      _
    %422 = vsyncpa [#allocation3], 1
    %423 = vsyncpa [#allocation6], 1
    %424 = vsyncpa [#allocation4], 1

</llo_original>
